<compile_context>
chip_gen: v7x
topology: tpu7x:2x2x1
jax: 0.10.0
libtpu: 0.0.40
codegen_flags: <defaults>
</compile_context>

<pallas_src>
import functools

import jax
import jax.numpy as jnp
from jax.experimental import pallas as pl
from jax.experimental.pallas import tpu as pltpu

_MIB = 1024 * 1024


def _round_up(a, b):
    return ((a + b - 1) // b) * b


@functools.lru_cache(maxsize=1)
def _vmem_config():
    """Returns (vmem_limit_bytes, pipeline_budget_bytes), generation aware."""
    try:
        phys = int(pltpu.get_tpu_info().vmem_capacity_bytes)
    except Exception:
        phys = None
    if phys is None:
        phys = 64 * _MIB  # conservative default: v7x-sized VMEM
    if phys >= 128 * _MIB:  # v5e / v6e: 128 MiB physical VMEM
        return 96 * _MIB, 72 * _MIB
    # v7x: 64 MiB physical per TensorCore
    return 48 * _MIB, 36 * _MIB


# ---------------------------------------------------------------------------
# Kernels
# ---------------------------------------------------------------------------
def _nconv_dense_kernel(x_ref, a_ref, o_ref):
    # x_ref: (blk, V*L)   lane-dense block of x (free reshape of NCVL)
    # a_ref: (V*L, W*L)   kron(A, I_L), VMEM-resident (constant index map)
    # o_ref: (blk, W*L)   lane-dense block of the output (free reshape of NCWL)
    o_ref[...] = jnp.dot(
        x_ref[...], a_ref[...], preferred_element_type=jnp.float32
    ).astype(o_ref.dtype)


def _nconv_3d_kernel(x_ref, a_ref, o_ref):
    # Fallback (large graphs): x_ref (blk, V, Lp), a_ref (V, W), o_ref (blk, W, Lp).
    blk, V, Lp = x_ref.shape
    W = a_ref.shape[1]
    xt = jnp.transpose(x_ref[...], (0, 2, 1))  # (blk, Lp, V) -- in-VMEM relayout
    x2 = xt.reshape(blk * Lp, V)  # layout no-op (Lp padded to a sublane multiple)
    r = jnp.dot(x2, a_ref[...], preferred_element_type=jnp.float32)  # (blk*Lp, W)
    r3 = r.reshape(blk, Lp, W)
    o_ref[...] = jnp.transpose(r3, (0, 2, 1)).astype(o_ref.dtype)


# ---------------------------------------------------------------------------
# Wrapper
# ---------------------------------------------------------------------------
@functools.partial(jax.jit, static_argnames=("block_nc", "force_3d"))
def nconv(x, A, *, block_nc=None, force_3d=False):
    """out[n,c,w,l] = sum_v x[n,c,v,l] * A[v,w]  (== torch.einsum('ncvl,vw->ncwl'))."""
    N, C, V, L = x.shape
    Vk, W = A.shape
    assert Vk == V, (Vk, V)
    out_dtype = x.dtype
    A = A.astype(x.dtype)  # keep inputs narrow; accumulation is forced to f32

    NC = N * C
    isz = jnp.dtype(x.dtype).itemsize
    sub = max(8, 32 // max(1, isz))  # sublane multiple: 8 (f32), 16 (bf16), 32 (int8)

    vmem_limit, budget = _vmem_config()
    budget -= 2 * _MIB  # headroom for compiler-internal scratch

    # ------------------------------------------------------------------
    # Lane-dense path: (NC, V*L) @ kron(A, I_L) -> (NC, W*L).
    # Only when kron(A, I_L) comfortably fits in VMEM.
    # ------------------------------------------------------------------
    dense_ok = (not force_3d) and (V * L) * (W * L) * isz <= 4 * _MIB
    if dense_ok:
        VL, WL = V * L, W * L
        x2 = x.reshape(NC, VL)  # free reshape (contiguous-dim merge), no transpose
        a_t = jnp.kron(A, jnp.eye(L, dtype=A.dtype))  # (VL, WL)

        # Real VMEM footprint per NC row (lane-padded), x + out double-buffered
        # plus the f32 matmul result before the cast.
        x_row = _round_up(VL, 128) * isz
        o_row = _round_up(WL, 128) * isz
        t_row = _round_up(WL, 128) * 4
        a_bytes = 2 * _round_up(VL, sub) * _round_up(WL, 128) * isz
        per_row = 2 * (x_row + o_row) + 2 * t_row

        if block_nc is None:
            blk = max(1, (budget - a_bytes) // per_row)
            # Keep >= 8 grid steps on big problems so v7x megacore has work.
            if NC >= 16 * sub:
                blk = min(blk, max(sub, (NC // 8) // sub * sub))
        else:
            blk = block_nc
        blk = int(max(1, min(blk, NC)))
        if blk < NC:
            blk = min(NC, max(sub, (blk // sub) * sub))  # sublane-aligned block rows

        grid = (pl.cdiv(NC, blk),)
        cost = pl.CostEstimate(
            flops=2 * NC * VL * WL,
            transcendentals=0,
            bytes_accessed=isz * (NC * VL + VL * WL + NC * WL),
        )
        out2 = pl.pallas_call(
            _nconv_dense_kernel,
            out_shape=jax.ShapeDtypeStruct((NC, WL), out_dtype),
            grid_spec=pltpu.PrefetchScalarGridSpec(
                num_scalar_prefetch=0,
                grid=grid,
                in_specs=[
                    pl.BlockSpec((blk, VL), lambda i: (i, 0)),  # x block
                    pl.BlockSpec((VL, WL), lambda i: (0, 0)),   # kron(A, I_L)
                ],
                out_specs=pl.BlockSpec((blk, WL), lambda i: (i, 0)),
            ),
            compiler_params=pltpu.CompilerParams(
                dimension_semantics=("parallel",),  # megacore shard on v7x
                vmem_limit_bytes=vmem_limit,
            ),
            cost_estimate=cost,
        )(x2, a_t)
        return out2.reshape(N, C, W, L)  # free reshape

    # ------------------------------------------------------------------
    # Fallback path (large graphs): 3-D blocks in natural NCVL / NCWL layout.
    # ------------------------------------------------------------------
    Lp = _round_up(L, sub)  # sublane multiple so in-kernel reshape is a layout no-op
    if Lp != L:
        x = jnp.pad(x, ((0, 0), (0, 0), (0, 0), (0, Lp - L)))
    x3 = x.reshape(NC, V, Lp)  # free reshape, no transpose

    # Padded VMEM footprint per NC row: (V, Lp) and (W, Lp) slabs live in
    # (sub, 128) tiles; plus the transposed temp and the f32 matmul result.
    x_row = _round_up(V, sub) * _round_up(Lp, 128) * isz
    o_row = _round_up(W, sub) * _round_up(Lp, 128) * isz
    t1_row = _round_up(Lp, 8) * _round_up(V, 128) * 4
    t2_row = _round_up(Lp, 8) * _round_up(W, 128) * 4
    a_bytes = 2 * _round_up(V, sub) * _round_up(W, 128) * isz
    per_row = 2 * (x_row + o_row) + t1_row + 2 * t2_row

    if block_nc is None:
        blk = max(1, (budget - a_bytes) // per_row)
        if NC >= 16 * 8:
            blk = min(blk, max(8, (NC // 8) // 8 * 8))  # >= 8 grid steps
    else:
        blk = block_nc
    blk = int(max(1, min(blk, NC)))
    if blk < NC and blk >= 8:
        blk = (blk // 8) * 8

    grid = (pl.cdiv(NC, blk),)
    cost = pl.CostEstimate(
        flops=2 * NC * Lp * V * W,
        transcendentals=0,
        bytes_accessed=isz * (NC * V * Lp + V * W + NC * W * Lp),
    )
    out3 = pl.pallas_call(
        _nconv_3d_kernel,
        out_shape=jax.ShapeDtypeStruct((NC, W, Lp), out_dtype),
        grid_spec=pltpu.PrefetchScalarGridSpec(
            num_scalar_prefetch=0,
            grid=grid,
            in_specs=[
                pl.BlockSpec((blk, V, Lp), lambda i: (i, 0, 0)),  # x block
                pl.BlockSpec((V, W), lambda i: (0, 0)),           # full A
            ],
            out_specs=pl.BlockSpec((blk, W, Lp), lambda i: (i, 0, 0)),
        ),
        compiler_params=pltpu.CompilerParams(
            dimension_semantics=("parallel",),
            vmem_limit_bytes=vmem_limit,
        ),
        cost_estimate=cost,
    )(x3, A)
    out = out3.reshape(N, C, W, Lp)  # free reshape
    if Lp != L:
        out = out[..., :L]
    return out


if __name__ == "__main__":
    key = jax.random.PRNGKey(0)
    kx, ka = jax.random.split(key)

    # Small shapes consistent with nconv: x (N, C, V, L), A (V, W).
    N, C, V, L, W = 2, 4, 16, 8, 16
    x = jax.random.normal(kx, (N, C, V, L), dtype=jnp.float32)
    A = jax.random.normal(ka, (V, W), dtype=jnp.float32)

    # Reference (full-precision matmul so the comparison is meaningful).
    ref = jnp.einsum("ncvl,vw->ncwl", x, A, precision=jax.lax.Precision.HIGHEST)

    # Lane-dense (kron) path -- the default for these shapes.
    out = jax.block_until_ready(nconv(x, A))
    assert out.shape == (N, C, W, L), out.shape
    assert jnp.allclose(out, ref, atol=1e-4, rtol=1e-4), "dense path mismatch"

    # Large-graph fallback path (forced here to keep it exercised/compiling).
    out3d = jax.block_until_ready(nconv(x, A, force_3d=True))
    assert out3d.shape == (N, C, W, L), out3d.shape
    assert jnp.allclose(out3d, ref, atol=1e-4, rtol=1e-4), "3-D path mismatch"

    # NOTE: torch's .contiguous() is a no-op in JAX (arrays are always dense).
    print("KERNEL_OK")
</pallas_src>

<mosaic_0001>
module attributes {stable_mosaic.version = 11 : i64} {
  func.func @_nconv_dense_kernel(%arg0: i32, %arg1: memref<8x128xf32, #tpu.memory_space<vmem>>, %arg2: memref<128x128xf32, #tpu.memory_space<vmem>>, %arg3: memref<8x128xf32, #tpu.memory_space<vmem>>) attributes {dimension_semantics = [#tpu.dimension_semantics<parallel>], iteration_bounds = array<i64: 1>, scalar_prefetch = 0 : i64, scratch_operands = 0 : i64, tpu.core_type = #tpu.core_type<tc>, window_params = [{transform_indices = @transform_0, window_bounds = array<i64: 8, 128>}, {pipeline_mode = #tpu.pipeline_mode<synchronous>, transform_indices = @transform_1, window_bounds = array<i64: 128, 128>}, {transform_indices = @transform_2, window_bounds = array<i64: 8, 128>}]} {
    %c0 = arith.constant 0 : index
    %c0_0 = arith.constant 0 : index
    %0 = vector.load %arg1[%c0, %c0_0] : memref<8x128xf32, #tpu.memory_space<vmem>>, vector<8x128xf32>
    %c0_1 = arith.constant 0 : index
    %c0_2 = arith.constant 0 : index
    %1 = vector.load %arg2[%c0_1, %c0_2] : memref<128x128xf32, #tpu.memory_space<vmem>>, vector<128x128xf32>
    %cst = arith.constant dense<0.000000e+00> : vector<8x128xf32>
    %2 = tpu.matmul %0, %1, %cst {dimension_numbers = #tpu.dot_dimension_numbers<[1], [0], [0], [1], [0, 0, 1, 1], [], []>} : vector<8x128xf32>, vector<128x128xf32>, vector<8x128xf32> -> vector<8x128xf32>
    %c0_3 = arith.constant 0 : index
    %c0_4 = arith.constant 0 : index
    %3 = vector.load %arg3[%c0_3, %c0_4] : memref<8x128xf32, #tpu.memory_space<vmem>>, vector<8x128xf32>
    tpu.vector_store %arg3[%c0_3, %c0_4], %2 {strides = array<i32>} : memref<8x128xf32, #tpu.memory_space<vmem>>, vector<8x128xf32>,
    return
  }
  func.func @transform_0(%arg0: i32) -> (i32, i32) {
    %c0_i32 = arith.constant 0 : i32
    %c0_i32_0 = arith.constant 0 : i32
    return %arg0, %c0_i32 : i32, i32
  }
  func.func @transform_1(%arg0: i32) -> (i32, i32) {
    %c0_i32 = arith.constant 0 : i32
    %c0_i32_0 = arith.constant 0 : i32
    %c0_i32_1 = arith.constant 0 : i32
    return %c0_i32, %c0_i32_0 : i32, i32
  }
  func.func @transform_2(%arg0: i32) -> (i32, i32) {
    %c0_i32 = arith.constant 0 : i32
    %c0_i32_0 = arith.constant 0 : i32
    return %arg0, %c0_i32 : i32, i32
  }
}

</mosaic_0001>

<llo_original>
// kernel: nconv.1
$region0: #{nconv.1}
  #allocation0 [shape = 'u32[]', space=smem, size = 0x4, offset = 0x4, fixed_abs, tag = 'smem constant byte address 0x4 - core index']
  #allocation1 [shape = 'u32[144,128]{1,0:T(1,128)}', space=vmem, size = 0x12000, scoped, tag = 'internal scratch']
  %s0 = inlined_call_operand.vmem [shape: f32[8,128], index: 0, kind: input, shape index: {}]
  %s1 = inlined_call_operand.vmem [shape: f32[128,128], index: 1, kind: input, shape index: {}]
  %s2 = inlined_call_operand.vmem [shape: f32[8,128], index: 2, kind: output, shape index: {}]
  %s3 = sld [smem:[#allocation0]]
  $region18: #{nconv.1} parent=0
    _
  %s5 = ssub.s32 1, %s3
  %s6 = scalar_select 0, %s5, %s3
  // Predicated region
  $region2: #{nconv.1} parent=0 // pred_check
    _
  $region3: #{nconv.1} parent=0 // pred_check_branch
    %8 = sbr.rel (0) target = $region5
  $region4: #{nconv.1} parent=0 // pred_region
    _
  $region5: #{nconv.1} parent=0 // pred_fallthru
    _
  // Predicated region
  $region6: #{nconv.1} parent=0 // pred_check
    _
  $region7: #{nconv.1} parent=0 // pred_check_branch
    %10 = sbr.rel (0) target = $region9
  $region8: #{nconv.1} parent=0 // pred_region
    _
  $region9: #{nconv.1} parent=0 // pred_fallthru
    _
  %v11 = vld [vmem:[%s0] sm:$0xff]
  %v12 = vld [vmem:[%s1] sm:$0xff]
  %v13 = vld [vmem:[%s1 + $0x8] sm:$0xff]
  %v14 = vld [vmem:[%s1 + $0x10] sm:$0xff]
  %v15 = vld [vmem:[%s1 + $0x18] sm:$0xff]
  %v16 = vld [vmem:[%s1 + $0x20] sm:$0xff]
  %v17 = vld [vmem:[%s1 + $0x28] sm:$0xff]
  %v18 = vld [vmem:[%s1 + $0x30] sm:$0xff]
  %v19 = vld [vmem:[%s1 + $0x38] sm:$0xff]
  %v20 = vld [vmem:[%s1 + $0x40] sm:$0xff]
  %v21 = vld [vmem:[%s1 + $0x48] sm:$0xff]
  %v22 = vld [vmem:[%s1 + $0x50] sm:$0xff]
  %v23 = vld [vmem:[%s1 + $0x58] sm:$0xff]
  %v24 = vld [vmem:[%s1 + $0x60] sm:$0xff]
  %v25 = vld [vmem:[%s1 + $0x68] sm:$0xff]
  %v26 = vld [vmem:[%s1 + $0x70] sm:$0xff]
  %v27 = vld [vmem:[%s1 + $0x78] sm:$0xff]
  %28 = vmatprep.subr.mxu0 0.0
  %29 = vmatpush1.msra.mxu0 %v12
  %30 = vmatprep.subr.mxu0 0.0
  %31 = vmatpush1.msra.mxu0 %v13
  %32 = vmatprep.subr.mxu0 0.0
  %33 = vmatpush1.msra.mxu0 %v14
  %34 = vmatprep.subr.mxu0 0.0
  %35 = vmatpush1.msra.mxu0 %v15
  %36 = vmatprep.subr.mxu0 0.0
  %37 = vmatpush1.msra.mxu0 %v16
  %38 = vmatprep.subr.mxu0 0.0
  %39 = vmatpush1.msra.mxu0 %v17
  %40 = vmatprep.subr.mxu0 0.0
  %41 = vmatpush1.msra.mxu0 %v18
  %42 = vmatprep.subr.mxu0 0.0
  %43 = vmatpush1.msra.mxu0 %v19
  %44 = vmatprep.subr.mxu0 0.0
  %45 = vmatpush1.msra.mxu0 %v20
  %46 = vmatprep.subr.mxu0 0.0
  %47 = vmatpush1.msra.mxu0 %v21
  %48 = vmatprep.subr.mxu0 0.0
  %49 = vmatpush1.msra.mxu0 %v22
  %50 = vmatprep.subr.mxu0 0.0
  %51 = vmatpush1.msra.mxu0 %v23
  %52 = vmatprep.subr.mxu0 0.0
  %53 = vmatpush1.msra.mxu0 %v24
  %54 = vmatprep.subr.mxu0 0.0
  %55 = vmatpush1.msra.mxu0 %v25
  %56 = vmatprep.subr.mxu0 0.0
  %57 = vmatpush1.msra.mxu0 %v26
  %58 = vmatprep.subr.mxu0 0.0
  %59 = vmatpush1.msra.mxu0 %v27
  %60 = vmatprep.subr.mxu0 0.0
  %61 = vmatpush1.msra.mxu0 0.0
  %62 = vmatprep.subr.mxu0 0.0
  %63 = vmatpush1.msra.mxu0 0.0
  %64 = vmatprep.subr.mxu0 0.0
  %65 = vmatpush1.msra.mxu0 0.0
  %66 = vmatprep.subr.mxu0 0.0
  %67 = vmatpush1.msra.mxu0 0.0
  %68 = vmatprep.subr.mxu0 0.0
  %69 = vmatpush1.msra.mxu0 0.0
  %70 = vmatprep.subr.mxu0 0.0
  %71 = vmatpush1.msra.mxu0 0.0
  %72 = vmatprep.subr.mxu0 0.0
  %73 = vmatpush1.msra.mxu0 0.0
  %74 = vmatprep.subr.mxu0 0.0
  %75 = vmatpush1.msra.mxu0 0.0
  %76 = vmatprep.subr.mxu0 0.0
  %77 = vmatpush1.msra.mxu0 0.0
  %78 = vmatprep.subr.mxu0 0.0
  %79 = vmatpush1.msra.mxu0 0.0
  %80 = vmatprep.subr.mxu0 0.0
  %81 = vmatpush1.msra.mxu0 0.0
  %82 = vmatprep.subr.mxu0 0.0
  %83 = vmatpush1.msra.mxu0 0.0
  %84 = vmatprep.subr.mxu0 0.0
  %85 = vmatpush1.msra.mxu0 0.0
  %86 = vmatprep.subr.mxu0 0.0
  %87 = vmatpush1.msra.mxu0 0.0
  %88 = vmatprep.subr.mxu0 0.0
  %89 = vmatpush1.msra.mxu0 0.0
  %90 = vmatprep.subr.mxu0 0.0
  %91 = vmatpush1.msra.mxu0 0.0
  %92 = vmatprep.mubr.f32.mxu0 0.0
  %93 = vmatmul.mubr.f32.gmra.mrb[0].mxu0 %v11
  %v94 = vpop.f32.mrb[0].mxu0
  %v95 = vadd.f32 0.0, %v94
  %v96 = vpop.f32.mrb[0].mxu0
  %97 = vdwg.mxu0
  %98 = vst [vmem:[%s2] sm:$0xff] %v95
  // Predicated region
  $region10: #{nconv.1} parent=0 // pred_check
    _
  $region11: #{nconv.1} parent=0 // pred_check_branch
    %100 = sbr.rel (0) target = $region13
  $region12: #{nconv.1} parent=0 // pred_region
    _
  $region13: #{nconv.1} parent=0 // pred_fallthru
    _
  // Predicated region
  $region14: #{nconv.1} parent=0 // pred_check
    _
  $region15: #{nconv.1} parent=0 // pred_check_branch
    %102 = sbr.rel (0) target = $region17
  $region16: #{nconv.1} parent=0 // pred_region
    _
  $region17: #{nconv.1} parent=0 // pred_fallthru
    _

</llo_original>
